<compile_context>
chip_gen: v6e
topology: v6e:2x2x1
jax: 0.10.0
libtpu: 0.0.40
codegen_flags: <defaults>
</compile_context>

<pallas_src>
import functools

import jax
import jax.numpy as jnp
from jax.experimental import pallas as pl
from jax.experimental.pallas import tpu as pltpu


# -----------------------------------------------------------------------------
# Batch-tile selection.  bt == B is always BlockSpec-legal (every block equals
# the full array).  bt < B additionally requires bt % 8 == 0 so that the
# flattened-row input blocks (bt*(S-1), E) / (bt*(K-1), E) and the depot blocks
# (bt, 1, E) stay sublane-aligned.
# -----------------------------------------------------------------------------
def _pick_batch_tile(B, S, K, target_rows=512):
    cap = max(1, target_rows // max(S, K))
    if B <= cap:
        return B
    best = None
    for d in range(8, cap + 1, 8):
        if B % d == 0:
            best = d
    return best if best is not None else B


# -----------------------------------------------------------------------------
# Kernel: _combine_embeddings + Linear(2E -> E) for one batch tile.
# -----------------------------------------------------------------------------
def _combine_kernel(shelf_rest_ref, item_rest_ref, shelf_dep_ref, item_dep_ref,
                    ws_ref, wi_ref, b_ref, pairs_ref, depot_ref,
                    *, bt, S, K, E):
    # ---- MXU: batched matmuls over the whole batch tile ---------------------
    # Bias rides on the shelf side so every output token gets it exactly once.
    shelf_proj = jnp.dot(shelf_rest_ref[...], ws_ref[...],
                         preferred_element_type=jnp.float32) + b_ref[...]   # (bt*(S-1), E)
    item_proj = jnp.dot(item_rest_ref[...], wi_ref[...],
                        preferred_element_type=jnp.float32)                 # (bt*(K-1), E)

    # Depot tokens: fully vectorized across the batch tile.
    sd = shelf_dep_ref[...][:, 0, :]                                        # (bt, E)
    idp = item_dep_ref[...][:, 0, :]                                        # (bt, E)
    depot = (jnp.dot(sd, ws_ref[...], preferred_element_type=jnp.float32)
             + b_ref[...]
             + jnp.dot(idp, wi_ref[...], preferred_element_type=jnp.float32))
    depot_ref[...] = depot[:, None, :].astype(depot_ref.dtype)

    # ---- VPU epilogue: lane-dense pair slabs, one full-block store ----------
    #   pairs[b, s-1, (k-1)*E + e] = shelf_proj[b, s-1, e] + item_proj[b, k-1, e]
    slabs = []
    for b in range(bt):  # static unroll over the (small) batch tile
        sp = shelf_proj[b * (S - 1):(b + 1) * (S - 1), :]    # (S-1, E) static slice
        ip = item_proj[b * (K - 1):(b + 1) * (K - 1), :]     # (K-1, E) static slice
        shelf_tiled = jnp.concatenate([sp] * (K - 1), axis=-1)              # (S-1, (K-1)*E)
        item_row = jnp.concatenate([ip[k:k + 1, :] for k in range(K - 1)],
                                   axis=-1)                                 # (1, (K-1)*E)
        slabs.append(shelf_tiled + item_row)
    pairs_ref[...] = jnp.stack(slabs, axis=0).astype(pairs_ref.dtype)


def combine_embeddings_pallas(shelf_emb, item_emb, linear_w, linear_b,
                              batch_tile=None):
    """shelf_emb (B,S,E), item_emb (B,K,E), linear_w (2E,E) [= weight.T],
    linear_b (E,).  Returns comb_emb (B, 1 + (S-1)*(K-1), E)."""
    B, S, E = shelf_emb.shape
    K = item_emb.shape[1]
    assert linear_w.shape == (2 * E, E) and linear_b.shape == (E,)
    P = (S - 1) * (K - 1)

    bt = _pick_batch_tile(B, S, K) if batch_tile is None else batch_tile
    assert B % bt == 0

    # Split the weight outside the kernel (no in-kernel sublane slicing of W).
    w_shelf = linear_w[:E, :]
    w_item = linear_w[E:, :]
    bias2d = linear_b.reshape(1, E)

    # Wrapper-side layout plumbing: depot rows split off, rest rows flattened
    # into matmul rows.  These copies are tiny vs the N-token output.
    shelf_rest = shelf_emb[:, 1:, :].reshape(B * (S - 1), E)
    item_rest = item_emb[:, 1:, :].reshape(B * (K - 1), E)
    shelf_dep = shelf_emb[:, 0:1, :]    # (B, 1, E)
    item_dep = item_emb[:, 0:1, :]      # (B, 1, E)

    kernel = functools.partial(_combine_kernel, bt=bt, S=S, K=K, E=E)
    pairs, depot = pl.pallas_call(
        kernel,
        out_shape=(
            # lane-dense pair slab: last dim (K-1)*E (= 128 at demo shapes)
            jax.ShapeDtypeStruct((B, S - 1, (K - 1) * E), shelf_emb.dtype),
            # one depot token per batch element (tiny separate output)
            jax.ShapeDtypeStruct((B, 1, E), shelf_emb.dtype),
        ),
        grid=(B // bt,),
        in_specs=[
            pl.BlockSpec((bt * (S - 1), E), lambda b: (b, 0)),
            pl.BlockSpec((bt * (K - 1), E), lambda b: (b, 0)),
            pl.BlockSpec((bt, 1, E), lambda b: (b, 0, 0)),
            pl.BlockSpec((bt, 1, E), lambda b: (b, 0, 0)),
            pl.BlockSpec((E, E), lambda b: (0, 0)),
            pl.BlockSpec((E, E), lambda b: (0, 0)),
            pl.BlockSpec((1, E), lambda b: (0, 0)),
        ],
        out_specs=(
            pl.BlockSpec((bt, S - 1, (K - 1) * E), lambda b: (b, 0, 0)),
            pl.BlockSpec((bt, 1, E), lambda b: (b, 0, 0)),
        ),
        compiler_params=pltpu.CompilerParams(
            dimension_semantics=("parallel",),
            vmem_limit_bytes=32 * 1024 * 1024,
        ),
    )(shelf_rest, item_rest, shelf_dep, item_dep, w_shelf, w_item, bias2d)

    # Plain-XLA layout plumbing back to the reference (B, N, E) layout:
    # (B, S-1, (K-1)*E) -> (B, (S-1)*(K-1), E), depot token prepended.
    pairs = pairs.reshape(B, P, E)
    return jnp.concatenate([depot, pairs], axis=1)


# -----------------------------------------------------------------------------
# _calc_log_likelihood: tiny (B,T) reduction -- intentionally plain XLA (a
# Pallas launch would cost more than the compute).  Mask semantics of the
# reference (log_p[mask] = 0) are wired in.
# -----------------------------------------------------------------------------
def calc_log_likelihood(probs, mask=None):
    log_p = jnp.log(probs)
    if mask is not None:
        log_p = jnp.where(mask, 0.0, log_p)
    if log_p.ndim == 3:
        log_p = jnp.sum(log_p, axis=2)
    return jnp.sum(log_p, axis=1)


# -----------------------------------------------------------------------------
# "Model" wrapper: the pieces of HetEncoderFlatDecoderModel.forward that are
# fully specified.
# TODO(synk): CombEncoder (HAM graph encoder), HetFlatDecoder rollout loop,
#             generator.finalize and StateMSVRP are not given -> the encoder
#             output is stood in by externally supplied shelf/item embeddings
#             and the rollout probs are a synthetic input.
# -----------------------------------------------------------------------------
def het_encoder_flat_decoder_forward(shelf_emb, item_emb, probs, params, mask=None):
    comb_emb = combine_embeddings_pallas(
        shelf_emb, item_emb, params["linear_w"], params["linear_b"])
    ll = calc_log_likelihood(probs, mask)
    return comb_emb, ll


# -----------------------------------------------------------------------------
# Pure-JAX reference (mirrors the PyTorch `_combine_embeddings` semantics with
# the depot interpretation documented above).
# -----------------------------------------------------------------------------
def combine_embeddings_ref(shelf_emb, item_emb, linear_w, linear_b):
    B, S, E = shelf_emb.shape
    K = item_emb.shape[1]
    sh = jnp.broadcast_to(shelf_emb[:, 1:, None, :], (B, S - 1, K - 1, E))
    it = jnp.broadcast_to(item_emb[:, None, 1:, :], (B, S - 1, K - 1, E))
    comb = jnp.concatenate([sh, it], axis=-1).reshape(B, (S - 1) * (K - 1), 2 * E)
    depot = jnp.concatenate([shelf_emb[:, 0:1], item_emb[:, 0:1]], axis=-1)
    comb = jnp.concatenate([depot, comb], axis=1)
    return jnp.dot(comb, linear_w,
                   precision=jax.lax.Precision.HIGHEST) + linear_b


if __name__ == "__main__":
    # Small, module-consistent shapes.
    B = 2          # batch
    S = 9          # shelves (incl. depot at index 0)
    K = 5          # skus    (incl. dummy at index 0)
    E = 32         # embedding_dim -> Linear(2E=64, E=32); (K-1)*E = 128 lanes
    T = 8          # decode steps for the log-likelihood demo

    key = jax.random.PRNGKey(0)
    k1, k2, k3, k4, k5 = jax.random.split(key, 5)

    def bf16_exact(x):
        # Round test data to bf16-representable values so the correctness check
        # is invariant to MXU input-truncation precision; the tight tolerance
        # below then strictly tests layout / ordering / bias semantics.
        return x.astype(jnp.bfloat16).astype(jnp.float32)

    shelf_emb = bf16_exact(jax.random.normal(k1, (B, S, E), dtype=jnp.float32))
    item_emb = bf16_exact(jax.random.normal(k2, (B, K, E), dtype=jnp.float32))

    # nn.Linear(2E, E): store weight.T as (2E, E), so y = x @ W + b.
    linear_w = bf16_exact(0.1 * jax.random.normal(k3, (2 * E, E), dtype=jnp.float32))
    linear_b = bf16_exact(0.1 * jax.random.normal(k4, (E,), dtype=jnp.float32))
    params = {"linear_w": linear_w, "linear_b": linear_b}

    # Synthetic per-step selection probabilities (strictly positive).
    probs = jax.random.uniform(k5, (B, T), minval=0.1, maxval=1.0, dtype=jnp.float32)

    comb_emb, ll = het_encoder_flat_decoder_forward(shelf_emb, item_emb, probs, params)
    comb_emb = jax.block_until_ready(comb_emb)
    ll = jax.block_until_ready(ll)

    # Correctness checks against pure-JAX references (tight tolerances).
    comb_ref = combine_embeddings_ref(shelf_emb, item_emb, linear_w, linear_b)
    ll_ref = jnp.sum(jnp.log(probs), axis=1)

    N = 1 + (S - 1) * (K - 1)
    assert comb_emb.shape == (B, N, E)
    assert ll.shape == (B,)
    assert jnp.allclose(comb_emb, comb_ref, rtol=1e-5, atol=1e-5), \
        float(jnp.max(jnp.abs(comb_emb - comb_ref)))
    assert jnp.allclose(ll, ll_ref, rtol=1e-5, atol=1e-5)

    # Masked log-likelihood path (log_p[mask] = 0), as in the reference.
    mask = jnp.zeros((B, T), dtype=bool).at[:, -2:].set(True)
    ll_masked = calc_log_likelihood(probs, mask)
    ll_masked_ref = jnp.sum(jnp.where(mask, 0.0, jnp.log(probs)), axis=1)
    assert jnp.allclose(ll_masked, ll_masked_ref, rtol=1e-5, atol=1e-5)

    print("KERNEL_OK")
</pallas_src>

<mosaic_0001>
module attributes {stable_mosaic.version = 11 : i64} {
  func.func @_combine_kernel(%arg0: i32, %arg1: memref<16x32xf32, #tpu.memory_space<vmem>>, %arg2: memref<8x32xf32, #tpu.memory_space<vmem>>, %arg3: memref<2x1x32xf32, #tpu.memory_space<vmem>>, %arg4: memref<2x1x32xf32, #tpu.memory_space<vmem>>, %arg5: memref<32x32xf32, #tpu.memory_space<vmem>>, %arg6: memref<32x32xf32, #tpu.memory_space<vmem>>, %arg7: memref<1x32xf32, #tpu.memory_space<vmem>>, %arg8: memref<2x8x128xf32, #tpu.memory_space<vmem>>, %arg9: memref<2x1x32xf32, #tpu.memory_space<vmem>>) attributes {dimension_semantics = [#tpu.dimension_semantics<parallel>], iteration_bounds = array<i64: 1>, scalar_prefetch = 0 : i64, scratch_operands = 0 : i64, tpu.core_type = #tpu.core_type<tc>, window_params = [{transform_indices = @transform_0, window_bounds = array<i64: 16, 32>}, {transform_indices = @transform_1, window_bounds = array<i64: 8, 32>}, {transform_indices = @transform_2, window_bounds = array<i64: 2, 1, 32>}, {transform_indices = @transform_3, window_bounds = array<i64: 2, 1, 32>}, {pipeline_mode = #tpu.pipeline_mode<synchronous>, transform_indices = @transform_4, window_bounds = array<i64: 32, 32>}, {pipeline_mode = #tpu.pipeline_mode<synchronous>, transform_indices = @transform_5, window_bounds = array<i64: 32, 32>}, {pipeline_mode = #tpu.pipeline_mode<synchronous>, transform_indices = @transform_6, window_bounds = array<i64: 1, 32>}, {transform_indices = @transform_7, window_bounds = array<i64: 2, 8, 128>}, {transform_indices = @transform_8, window_bounds = array<i64: 2, 1, 32>}]} {
    %c0 = arith.constant 0 : index
    %c0_0 = arith.constant 0 : index
    %0 = vector.load %arg1[%c0, %c0_0] : memref<16x32xf32, #tpu.memory_space<vmem>>, vector<16x32xf32>
    %c0_1 = arith.constant 0 : index
    %c0_2 = arith.constant 0 : index
    %1 = vector.load %arg5[%c0_1, %c0_2] : memref<32x32xf32, #tpu.memory_space<vmem>>, vector<32x32xf32>
    %cst = arith.constant dense<0.000000e+00> : vector<16x32xf32>
    %2 = tpu.matmul %0, %1, %cst {dimension_numbers = #tpu.dot_dimension_numbers<[1], [0], [0], [1], [0, 0, 1, 1], [], []>} : vector<16x32xf32>, vector<32x32xf32>, vector<16x32xf32> -> vector<16x32xf32>
    %c0_3 = arith.constant 0 : index
    %c0_4 = arith.constant 0 : index
    %3 = vector.load %arg7[%c0_3, %c0_4] : memref<1x32xf32, #tpu.memory_space<vmem>>, vector<1x32xf32>
    %4 = vector.broadcast %3 : vector<1x32xf32> to vector<16x32xf32>
    %5 = arith.addf %2, %4 : vector<16x32xf32>
    %c0_5 = arith.constant 0 : index
    %c0_6 = arith.constant 0 : index
    %6 = vector.load %arg2[%c0_5, %c0_6] : memref<8x32xf32, #tpu.memory_space<vmem>>, vector<8x32xf32>
    %c0_7 = arith.constant 0 : index
    %c0_8 = arith.constant 0 : index
    %7 = vector.load %arg6[%c0_7, %c0_8] : memref<32x32xf32, #tpu.memory_space<vmem>>, vector<32x32xf32>
    %cst_9 = arith.constant dense<0.000000e+00> : vector<8x32xf32>
    %8 = tpu.matmul %6, %7, %cst_9 {dimension_numbers = #tpu.dot_dimension_numbers<[1], [0], [0], [1], [0, 0, 1, 1], [], []>} : vector<8x32xf32>, vector<32x32xf32>, vector<8x32xf32> -> vector<8x32xf32>
    %c0_10 = arith.constant 0 : index
    %c0_11 = arith.constant 0 : index
    %c0_12 = arith.constant 0 : index
    %9 = vector.load %arg3[%c0_10, %c0_11, %c0_12] : memref<2x1x32xf32, #tpu.memory_space<vmem>>, vector<2x1x32xf32>
    %10 = vector.shape_cast %9 : vector<2x1x32xf32> to vector<2x32xf32>
    %c0_13 = arith.constant 0 : index
    %c0_14 = arith.constant 0 : index
    %c0_15 = arith.constant 0 : index
    %11 = vector.load %arg4[%c0_13, %c0_14, %c0_15] : memref<2x1x32xf32, #tpu.memory_space<vmem>>, vector<2x1x32xf32>
    %12 = vector.shape_cast %11 : vector<2x1x32xf32> to vector<2x32xf32>
    %c0_16 = arith.constant 0 : index
    %c0_17 = arith.constant 0 : index
    %13 = vector.load %arg5[%c0_16, %c0_17] : memref<32x32xf32, #tpu.memory_space<vmem>>, vector<32x32xf32>
    %cst_18 = arith.constant dense<0.000000e+00> : vector<2x32xf32>
    %14 = tpu.matmul %10, %13, %cst_18 {dimension_numbers = #tpu.dot_dimension_numbers<[1], [0], [0], [1], [0, 0, 1, 1], [], []>} : vector<2x32xf32>, vector<32x32xf32>, vector<2x32xf32> -> vector<2x32xf32>
    %c0_19 = arith.constant 0 : index
    %c0_20 = arith.constant 0 : index
    %15 = vector.load %arg7[%c0_19, %c0_20] : memref<1x32xf32, #tpu.memory_space<vmem>>, vector<1x32xf32>
    %16 = vector.broadcast %15 : vector<1x32xf32> to vector<2x32xf32>
    %17 = arith.addf %14, %16 : vector<2x32xf32>
    %c0_21 = arith.constant 0 : index
    %c0_22 = arith.constant 0 : index
    %18 = vector.load %arg6[%c0_21, %c0_22] : memref<32x32xf32, #tpu.memory_space<vmem>>, vector<32x32xf32>
    %cst_23 = arith.constant dense<0.000000e+00> : vector<2x32xf32>
    %19 = tpu.matmul %12, %18, %cst_23 {dimension_numbers = #tpu.dot_dimension_numbers<[1], [0], [0], [1], [0, 0, 1, 1], [], []>} : vector<2x32xf32>, vector<32x32xf32>, vector<2x32xf32> -> vector<2x32xf32>
    %20 = arith.addf %17, %19 : vector<2x32xf32>
    %21 = vector.shape_cast %20 : vector<2x32xf32> to vector<2x1x32xf32>
    %c0_24 = arith.constant 0 : index
    %c0_25 = arith.constant 0 : index
    %c0_26 = arith.constant 0 : index
    %22 = vector.load %arg9[%c0_24, %c0_25, %c0_26] : memref<2x1x32xf32, #tpu.memory_space<vmem>>, vector<2x1x32xf32>
    tpu.vector_store %arg9[%c0_24, %c0_25, %c0_26], %21 {strides = array<i32>} : memref<2x1x32xf32, #tpu.memory_space<vmem>>, vector<2x1x32xf32>,
    %23 = vector.extract_strided_slice %5 {offsets = [0, 0], sizes = [8, 32], strides = [1, 1]} : vector<16x32xf32> to vector<8x32xf32>
    %24 = vector.extract_strided_slice %8 {offsets = [0, 0], sizes = [4, 32], strides = [1, 1]} : vector<8x32xf32> to vector<4x32xf32>
    %25 = tpu.concatenate %23, %23, %23, %23 in 1 : vector<8x32xf32>, vector<8x32xf32>, vector<8x32xf32>, vector<8x32xf32> -> vector<8x128xf32>
    %26 = vector.extract_strided_slice %24 {offsets = [0, 0], sizes = [1, 32], strides = [1, 1]} : vector<4x32xf32> to vector<1x32xf32>
    %27 = vector.extract_strided_slice %24 {offsets = [1, 0], sizes = [1, 32], strides = [1, 1]} : vector<4x32xf32> to vector<1x32xf32>
    %28 = vector.extract_strided_slice %24 {offsets = [2, 0], sizes = [1, 32], strides = [1, 1]} : vector<4x32xf32> to vector<1x32xf32>
    %29 = vector.extract_strided_slice %24 {offsets = [3, 0], sizes = [1, 32], strides = [1, 1]} : vector<4x32xf32> to vector<1x32xf32>
    %30 = tpu.concatenate %26, %27, %28, %29 in 1 : vector<1x32xf32>, vector<1x32xf32>, vector<1x32xf32>, vector<1x32xf32> -> vector<1x128xf32>
    %31 = vector.broadcast %30 : vector<1x128xf32> to vector<8x128xf32>
    %32 = arith.addf %25, %31 : vector<8x128xf32>
    %33 = vector.extract_strided_slice %5 {offsets = [8, 0], sizes = [8, 32], strides = [1, 1]} : vector<16x32xf32> to vector<8x32xf32>
    %34 = vector.extract_strided_slice %8 {offsets = [4, 0], sizes = [4, 32], strides = [1, 1]} : vector<8x32xf32> to vector<4x32xf32>
    %35 = tpu.concatenate %33, %33, %33, %33 in 1 : vector<8x32xf32>, vector<8x32xf32>, vector<8x32xf32>, vector<8x32xf32> -> vector<8x128xf32>
    %36 = vector.extract_strided_slice %34 {offsets = [0, 0], sizes = [1, 32], strides = [1, 1]} : vector<4x32xf32> to vector<1x32xf32>
    %37 = vector.extract_strided_slice %34 {offsets = [1, 0], sizes = [1, 32], strides = [1, 1]} : vector<4x32xf32> to vector<1x32xf32>
    %38 = vector.extract_strided_slice %34 {offsets = [2, 0], sizes = [1, 32], strides = [1, 1]} : vector<4x32xf32> to vector<1x32xf32>
    %39 = vector.extract_strided_slice %34 {offsets = [3, 0], sizes = [1, 32], strides = [1, 1]} : vector<4x32xf32> to vector<1x32xf32>
    %40 = tpu.concatenate %36, %37, %38, %39 in 1 : vector<1x32xf32>, vector<1x32xf32>, vector<1x32xf32>, vector<1x32xf32> -> vector<1x128xf32>
    %41 = vector.broadcast %40 : vector<1x128xf32> to vector<8x128xf32>
    %42 = arith.addf %35, %41 : vector<8x128xf32>
    %43 = vector.shape_cast %32 : vector<8x128xf32> to vector<1x8x128xf32>
    %44 = vector.shape_cast %42 : vector<8x128xf32> to vector<1x8x128xf32>
    %45 = tpu.concatenate %43, %44 in 0 : vector<1x8x128xf32>, vector<1x8x128xf32> -> vector<2x8x128xf32>
    %c0_27 = arith.constant 0 : index
    %c0_28 = arith.constant 0 : index
    %c0_29 = arith.constant 0 : index
    %46 = vector.load %arg8[%c0_27, %c0_28, %c0_29] : memref<2x8x128xf32, #tpu.memory_space<vmem>>, vector<2x8x128xf32>
    tpu.vector_store %arg8[%c0_27, %c0_28, %c0_29], %45 {strides = array<i32>} : memref<2x8x128xf32, #tpu.memory_space<vmem>>, vector<2x8x128xf32>,
    return
  }
  func.func @transform_0(%arg0: i32) -> (i32, i32) {
    %c0_i32 = arith.constant 0 : i32
    %c0_i32_0 = arith.constant 0 : i32
    return %arg0, %c0_i32 : i32, i32
  }
  func.func @transform_1(%arg0: i32) -> (i32, i32) {
    %c0_i32 = arith.constant 0 : i32
    %c0_i32_0 = arith.constant 0 : i32
    return %arg0, %c0_i32 : i32, i32
  }
  func.func @transform_2(%arg0: i32) -> (i32, i32, i32) {
    %c0_i32 = arith.constant 0 : i32
    %c0_i32_0 = arith.constant 0 : i32
    %c0_i32_1 = arith.constant 0 : i32
    return %arg0, %c0_i32, %c0_i32_0 : i32, i32, i32
  }
  func.func @transform_3(%arg0: i32) -> (i32, i32, i32) {
    %c0_i32 = arith.constant 0 : i32
    %c0_i32_0 = arith.constant 0 : i32
    %c0_i32_1 = arith.constant 0 : i32
    return %arg0, %c0_i32, %c0_i32_0 : i32, i32, i32
  }
  func.func @transform_4(%arg0: i32) -> (i32, i32) {
    %c0_i32 = arith.constant 0 : i32
    %c0_i32_0 = arith.constant 0 : i32
    %c0_i32_1 = arith.constant 0 : i32
    return %c0_i32, %c0_i32_0 : i32, i32
  }
  func.func @transform_5(%arg0: i32) -> (i32, i32) {
    %c0_i32 = arith.constant 0 : i32
    %c0_i32_0 = arith.constant 0 : i32
    %c0_i32_1 = arith.constant 0 : i32
    return %c0_i32, %c0_i32_0 : i32, i32
  }
  func.func @transform_6(%arg0: i32) -> (i32, i32) {
    %c0_i32 = arith.constant 0 : i32
    %c0_i32_0 = arith.constant 0 : i32
    %c0_i32_1 = arith.constant 0 : i32
    return %c0_i32, %c0_i32_0 : i32, i32
  }
  func.func @transform_7(%arg0: i32) -> (i32, i32, i32) {
    %c0_i32 = arith.constant 0 : i32
    %c0_i32_0 = arith.constant 0 : i32
    %c0_i32_1 = arith.constant 0 : i32
    return %arg0, %c0_i32, %c0_i32_0 : i32, i32, i32
  }
  func.func @transform_8(%arg0: i32) -> (i32, i32, i32) {
    %c0_i32 = arith.constant 0 : i32
    %c0_i32_0 = arith.constant 0 : i32
    %c0_i32_1 = arith.constant 0 : i32
    return %arg0, %c0_i32, %c0_i32_0 : i32, i32, i32
  }
}

</mosaic_0001>

<llo_original>
// kernel: tpu_custom_call.1
$region0: #{tpu_custom_call.1}
  #allocation0 [shape = 'u32[]', space=smem, size = 0x4, offset = 0x4, fixed_abs, tag = 'smem constant byte address 0x4 - core index']
  #allocation1 [shape = 'u32[144,128]{1,0:T(1,128)}', space=vmem, size = 0x12000, scoped, tag = 'internal scratch']
  %s0 = inlined_call_operand.hbm [shape: f32[16,32], index: 0, kind: input, shape index: {}]
  %s1 = inlined_call_operand.hbm [shape: f32[8,32], index: 1, kind: input, shape index: {}]
  %s2 = inlined_call_operand.vmem [shape: f32[2,1,32], index: 2, kind: input, shape index: {}]
  %s3 = inlined_call_operand.vmem [shape: f32[2,1,32], index: 3, kind: input, shape index: {}]
  %s4 = inlined_call_operand.hbm [shape: f32[32,32], index: 4, kind: input, shape index: {}]
  %s5 = inlined_call_operand.hbm [shape: f32[32,32], index: 5, kind: input, shape index: {}]
  %s6 = inlined_call_operand.vmem [shape: f32[1,32], index: 6, kind: input, shape index: {}]
  %s7 = inlined_call_operand.hbm [shape: f32[2,8,128], index: 7, kind: output, shape index: {0}]
  %s8 = inlined_call_operand.hbm [shape: f32[2,1,32], index: 8, kind: output, shape index: {1}]
  %9 = xla_tuple %s7, %s8
  %s10 = sld [smem:[#allocation0]]
  $region62: #{tpu_custom_call.1} parent=0
    _
  %s12 = ssub.s32 1, %s10
  %s13 = scalar_select 0, %s12, %s10
  $region1: #{tpu_custom_call.1} parent=0
    #allocation2 [shape = 'u8[8192]{0}', space=vmem, size = 0x2000, scoped, tag = 'input window, operand 0, single buffered']
    #allocation3 [shape = 's32[1]{0}', space=sflag, size = 0x4, scoped, tag = 'scoped memory for tpu_custom_call.1']
    #allocation4 [shape = 's32[1]{0}', space=sflag, size = 0x4, scoped, tag = 'scoped memory for tpu_custom_call.1']
    #allocation5 [shape = 'u8[4096]{0}', space=vmem, size = 0x1000, scoped, tag = 'input window, operand 1, single buffered']
    #allocation6 [shape = 's32[1]{0}', space=sflag, size = 0x4, scoped, tag = 'scoped memory for tpu_custom_call.1']
    #allocation7 [shape = 'u8[16384]{0}', space=vmem, size = 0x4000, scoped, tag = 'input window, operand 4, single buffered']
    #allocation8 [shape = 'u8[16384]{0}', space=vmem, size = 0x4000, scoped, tag = 'input window, operand 5, single buffered']
    #allocation9 [shape = 's32[1]{0}', space=sflag, size = 0x4, scoped, tag = 'scoped memory for tpu_custom_call.1']
    #allocation10 [shape = 'u8[8192]{0}', space=vmem, size = 0x2000, scoped, tag = 'output window, operand 0, single buffered']
    #allocation11 [shape = 'u8[1024]{0}', space=vmem, size = 0x400, scoped, tag = 'output window, operand 1, single buffered']
    #allocation12 [shape = 's32[1]{0}', space=sflag, size = 0x4, scoped, tag = 'scoped memory for tpu_custom_call.1']
    %14 = vsyncpa [#allocation3], 0
    %15 = vsyncpa [#allocation6], 0
    %16 = vsyncpa [#allocation9], 0
    %17 = vsyncpa [#allocation4], 0
    %18 = vsyncpa [#allocation12], 0
    // Predicated region
    $region2: #{tpu_custom_call.1} parent=1 // pred_check
      _
    $region3: #{tpu_custom_call.1} parent=1 // pred_check_branch
      %20 = sbr.rel (0) target = $region5
    $region4: #{tpu_custom_call.1} parent=1 // pred_region
      %s22 = ssub.s32 256, 256
      %23 = vsyncadd [#allocation3], %s22
      %s24 = sshll.u32 [#allocation2], 4
      %s25 = int_to_ptr.vmem [resolvable:$true] %s24
      %30 = dma.hbm_to_vmem [thread:$0]  %s0, 256, %s25, [#allocation3], 128, 128, 8
    $region5: #{tpu_custom_call.1} parent=1 // pred_fallthru
      _
    // Predicated region
    $region6: #{tpu_custom_call.1} parent=1 // pred_check
      _
    $region7: #{tpu_custom_call.1} parent=1 // pred_check_branch
      %32 = sbr.rel (0) target = $region9
    $region8: #{tpu_custom_call.1} parent=1 // pred_region
      %s34 = ssub.s32 128, 128
      %35 = vsyncadd [#allocation6], %s34
      %s37 = sshll.u32 [#allocation5], 4
      %s38 = int_to_ptr.vmem [resolvable:$true] %s37
      %40 = dma.hbm_to_vmem [thread:$0]  %s1, 128, %s38, [#allocation6]
    $region9: #{tpu_custom_call.1} parent=1 // pred_fallthru
      _
    // Predicated region
    $region10: #{tpu_custom_call.1} parent=1 // pred_check
      _
    $region11: #{tpu_custom_call.1} parent=1 // pred_check_branch
      %42 = sbr.rel (0) target = $region13
    $region12: #{tpu_custom_call.1} parent=1 // pred_region
      _
    $region13: #{tpu_custom_call.1} parent=1 // pred_fallthru
      _
    // Predicated region
    $region14: #{tpu_custom_call.1} parent=1 // pred_check
      _
    $region15: #{tpu_custom_call.1} parent=1 // pred_check_branch
      %44 = sbr.rel (0) target = $region17
    $region16: #{tpu_custom_call.1} parent=1 // pred_region
      _
    $region17: #{tpu_custom_call.1} parent=1 // pred_fallthru
      _
    // Predicated region
    $region18: #{tpu_custom_call.1} parent=1 // pred_check
      _
    $region19: #{tpu_custom_call.1} parent=1 // pred_check_branch
      %46 = sbr.rel (0) target = $region21
    $region20: #{tpu_custom_call.1} parent=1 // pred_region
      %s48 = ssub.s32 512, 512
      %49 = vsyncadd [#allocation6], %s48
      %s50 = sshll.u32 [#allocation7], 4
      %s51 = int_to_ptr.vmem [resolvable:$true] %s50
      %56 = dma.hbm_to_vmem [thread:$0]  %s4, 512, %s51, [#allocation6], 128, 128, 8
    $region21: #{tpu_custom_call.1} parent=1 // pred_fallthru
      _
    // Predicated region
    $region22: #{tpu_custom_call.1} parent=1 // pred_check
      _
    $region23: #{tpu_custom_call.1} parent=1 // pred_check_branch
      %58 = sbr.rel (0) target = $region25
    $region24: #{tpu_custom_call.1} parent=1 // pred_region
      %s60 = ssub.s32 512, 512
      %61 = vsyncadd [#allocation9], %s60
      %s62 = sshll.u32 [#allocation8], 4
      %s63 = int_to_ptr.vmem [resolvable:$true] %s62
      %68 = dma.hbm_to_vmem [thread:$0]  %s5, 512, %s63, [#allocation9], 128, 128, 8
    $region25: #{tpu_custom_call.1} parent=1 // pred_fallthru
      _
    // Predicated region
    $region26: #{tpu_custom_call.1} parent=1 // pred_check
      _
    $region27: #{tpu_custom_call.1} parent=1 // pred_check_branch
      %70 = sbr.rel (0) target = $region29
    $region28: #{tpu_custom_call.1} parent=1 // pred_region
      _
    $region29: #{tpu_custom_call.1} parent=1 // pred_fallthru
      _
    // Predicated region
    $region30: #{tpu_custom_call.1} parent=1 // pred_check
      _
    $region31: #{tpu_custom_call.1} parent=1 // pred_check_branch
      %72 = sbr.rel (0) target = $region33
    $region32: #{tpu_custom_call.1} parent=1 // pred_region
      %73 = dma.done [#allocation3], 256
    $region33: #{tpu_custom_call.1} parent=1 // pred_fallthru
      _
    // Predicated region
    $region34: #{tpu_custom_call.1} parent=1 // pred_check
      _
    $region35: #{tpu_custom_call.1} parent=1 // pred_check_branch
      %75 = sbr.rel (0) target = $region37
    $region36: #{tpu_custom_call.1} parent=1 // pred_region
      %76 = dma.done [#allocation6], 128
    $region37: #{tpu_custom_call.1} parent=1 // pred_fallthru
      _
    // Predicated region
    $region38: #{tpu_custom_call.1} parent=1 // pred_check
      _
    $region39: #{tpu_custom_call.1} parent=1 // pred_check_branch
      %78 = sbr.rel (0) target = $region41
    $region40: #{tpu_custom_call.1} parent=1 // pred_region
      %79 = dma.done [#allocation6], 512
    $region41: #{tpu_custom_call.1} parent=1 // pred_fallthru
      _
    // Predicated region
    $region42: #{tpu_custom_call.1} parent=1 // pred_check
      _
    $region43: #{tpu_custom_call.1} parent=1 // pred_check_branch
      %81 = sbr.rel (0) target = $region45
    $region44: #{tpu_custom_call.1} parent=1 // pred_region
      %82 = dma.done [#allocation9], 512
    $region45: #{tpu_custom_call.1} parent=1 // pred_fallthru
      _
    %v83 = vld [vmem:[#allocation2] sm:$0xff]
    %v84 = vld [vmem:[#allocation2 + $0x8] sm:$0xff]
    %v85 = vld [vmem:[#allocation7] sm:$0xff]
    %v86 = vld [vmem:[#allocation7 + $0x8] sm:$0xff]
    %v87 = vld [vmem:[#allocation7 + $0x10] sm:$0xff]
    %v88 = vld [vmem:[#allocation7 + $0x18] sm:$0xff]
    %v89 = vld [vmem:[%s6] sm:$0x1]
    %v91 = vlaneseq
    %v92 = vshrl.u32 %v91, 7
    %v93 = vsub.s32 0, %v92
    %v94 = vrot.slane %v89, %v93
    %vm96 = vcmask 261120
    %v98 = vsel %vm96, %v83, 0
    %v101 = vsel %vm96, %v84, 0
    %103 = vmatprep.subr.mxu0 0.0
    %104 = vmatpush1.msra.mxu0 0.0
    %105 = vmatprep.subr.mxu0 0.0
    %106 = vmatpush1.msra.mxu0 0.0
    %107 = vmatprep.subr.mxu0 0.0
    %108 = vmatpush1.msra.mxu0 0.0
    %109 = vmatprep.subr.mxu0 0.0
    %110 = vmatpush1.msra.mxu0 0.0
    %111 = vmatprep.subr.mxu0 0.0
    %112 = vmatpush1.msra.mxu0 0.0
    %113 = vmatprep.subr.mxu0 0.0
    %114 = vmatpush1.msra.mxu0 0.0
    %115 = vmatprep.subr.mxu0 0.0
    %116 = vmatpush1.msra.mxu0 0.0
    %117 = vmatprep.subr.mxu0 0.0
    %118 = vmatpush1.msra.mxu0 0.0
    %119 = vmatprep.subr.mxu0 0.0
    %120 = vmatpush1.msra.mxu0 0.0
    %121 = vmatprep.subr.mxu0 0.0
    %122 = vmatpush1.msra.mxu0 0.0
    %123 = vmatprep.subr.mxu0 0.0
    %124 = vmatpush1.msra.mxu0 0.0
    %125 = vmatprep.subr.mxu0 0.0
    %126 = vmatpush1.msra.mxu0 0.0
    %127 = vmatprep.subr.mxu0 0.0
    %128 = vmatpush1.msra.mxu0 %v88
    %129 = vmatprep.subr.mxu0 0.0
    %130 = vmatpush1.msra.mxu0 %v87
    %131 = vmatprep.subr.mxu0 0.0
    %132 = vmatpush1.msra.mxu0 %v86
    %133 = vmatprep.subr.mxu0 0.0
    %134 = vmatpush1.msra.mxu0 %v85
    %135 = vmatprep.subr.mxu0 0.0
    %136 = vmatpush2.msra.mxu0 0.0
    %137 = vmatprep.subr.mxu0 0.0
    %138 = vmatpush2.msra.mxu0 0.0
    %139 = vmatprep.subr.mxu0 0.0
    %140 = vmatpush2.msra.mxu0 0.0
    %141 = vmatprep.subr.mxu0 0.0
    %142 = vmatpush2.msra.mxu0 0.0
    %143 = vmatprep.subr.mxu0 0.0
    %144 = vmatpush2.msra.mxu0 0.0
    %145 = vmatprep.subr.mxu0 0.0
    %146 = vmatpush2.msra.mxu0 0.0
    %147 = vmatprep.subr.mxu0 0.0
    %148 = vmatpush2.msra.mxu0 0.0
    %149 = vmatprep.subr.mxu0 0.0
    %150 = vmatpush2.msra.mxu0 0.0
    %151 = vmatprep.subr.mxu0 0.0
    %152 = vmatpush2.msra.mxu0 0.0
    %153 = vmatprep.subr.mxu0 0.0
    %154 = vmatpush2.msra.mxu0 0.0
    %155 = vmatprep.subr.mxu0 0.0
    %156 = vmatpush2.msra.mxu0 0.0
    %157 = vmatprep.subr.mxu0 0.0
    %158 = vmatpush2.msra.mxu0 0.0
    %159 = vmatprep.subr.mxu0 0.0
    %160 = vmatpush2.msra.mxu0 0.0
    %161 = vmatprep.subr.mxu0 0.0
    %162 = vmatpush2.msra.mxu0 0.0
    %163 = vmatprep.subr.mxu0 0.0
    %164 = vmatpush2.msra.mxu0 0.0
    %165 = vmatprep.subr.mxu0 0.0
    %166 = vmatpush2.msra.mxu0 0.0
    %167 = vmatprep.mubr.f32.mxu0 0.0
    %168 = vmatmul.mubr.f32.gmra.mxu0 %v98
    %v169 = vpop.f32.mrf.mxu0
    %v170 = vadd.f32 %v94, %v169
    %v171 = vpop.f32.mrf.mxu0
    %172 = vmatprep.mubr.f32.mxu0 0.0
    %173 = vmatmul.mubr.f32.gmra.mxu0 %v101
    %v174 = vpop.f32.mrf.mxu0
    %v175 = vadd.f32 %v94, %v174
    %v176 = vpop.f32.mrf.mxu0
    %177 = vdwg.mxu0
    %v178 = vld [vmem:[#allocation5] sm:$0xff]
    %v179 = vld [vmem:[#allocation8] sm:$0xff]
    %v180 = vld [vmem:[#allocation8 + $0x8] sm:$0xff]
    %v181 = vld [vmem:[#allocation8 + $0x10] sm:$0xff]
    %v182 = vld [vmem:[#allocation8 + $0x18] sm:$0xff]
    %v184 = vsel %vm96, %v178, 0
    %186 = vmatprep.subr.mxu0 0.0
    %187 = vmatpush1.msra.mxu0 0.0
    %188 = vmatprep.subr.mxu0 0.0
    %189 = vmatpush1.msra.mxu0 0.0
    %190 = vmatprep.subr.mxu0 0.0
    %191 = vmatpush1.msra.mxu0 0.0
    %192 = vmatprep.subr.mxu0 0.0
    %193 = vmatpush1.msra.mxu0 0.0
    %194 = vmatprep.subr.mxu0 0.0
    %195 = vmatpush1.msra.mxu0 0.0
    %196 = vmatprep.subr.mxu0 0.0
    %197 = vmatpush1.msra.mxu0 0.0
    %198 = vmatprep.subr.mxu0 0.0
    %199 = vmatpush1.msra.mxu0 0.0
    %200 = vmatprep.subr.mxu0 0.0
    %201 = vmatpush1.msra.mxu0 0.0
    %202 = vmatprep.subr.mxu0 0.0
    %203 = vmatpush1.msra.mxu0 0.0
    %204 = vmatprep.subr.mxu0 0.0
    %205 = vmatpush1.msra.mxu0 0.0
    %206 = vmatprep.subr.mxu0 0.0
    %207 = vmatpush1.msra.mxu0 0.0
    %208 = vmatprep.subr.mxu0 0.0
    %209 = vmatpush1.msra.mxu0 0.0
    %210 = vmatprep.subr.mxu0 0.0
    %211 = vmatpush1.msra.mxu0 %v182
    %212 = vmatprep.subr.mxu0 0.0
    %213 = vmatpush1.msra.mxu0 %v181
    %214 = vmatprep.subr.mxu0 0.0
    %215 = vmatpush1.msra.mxu0 %v180
    %216 = vmatprep.subr.mxu0 0.0
    %217 = vmatpush1.msra.mxu0 %v179
    %218 = vmatprep.subr.mxu0 0.0
    %219 = vmatpush2.msra.mxu0 0.0
    %220 = vmatprep.subr.mxu0 0.0
    %221 = vmatpush2.msra.mxu0 0.0
    %222 = vmatprep.subr.mxu0 0.0
    %223 = vmatpush2.msra.mxu0 0.0
    %224 = vmatprep.subr.mxu0 0.0
    %225 = vmatpush2.msra.mxu0 0.0
    %226 = vmatprep.subr.mxu0 0.0
    %227 = vmatpush2.msra.mxu0 0.0
    %228 = vmatprep.subr.mxu0 0.0
    %229 = vmatpush2.msra.mxu0 0.0
    %230 = vmatprep.subr.mxu0 0.0
    %231 = vmatpush2.msra.mxu0 0.0
    %232 = vmatprep.subr.mxu0 0.0
    %233 = vmatpush2.msra.mxu0 0.0
    %234 = vmatprep.subr.mxu0 0.0
    %235 = vmatpush2.msra.mxu0 0.0
    %236 = vmatprep.subr.mxu0 0.0
    %237 = vmatpush2.msra.mxu0 0.0
    %238 = vmatprep.subr.mxu0 0.0
    %239 = vmatpush2.msra.mxu0 0.0
    %240 = vmatprep.subr.mxu0 0.0
    %241 = vmatpush2.msra.mxu0 0.0
    %242 = vmatprep.subr.mxu0 0.0
    %243 = vmatpush2.msra.mxu0 0.0
    %244 = vmatprep.subr.mxu0 0.0
    %245 = vmatpush2.msra.mxu0 0.0
    %246 = vmatprep.subr.mxu0 0.0
    %247 = vmatpush2.msra.mxu0 0.0
    %248 = vmatprep.subr.mxu0 0.0
    %249 = vmatpush2.msra.mxu0 0.0
    %250 = vmatprep.mubr.f32.mxu0 0.0
    %251 = vmatmul.mubr.f32.gmra.mxu0 %v184
    %v252 = vpop.f32.mrf.mxu0
    %v253 = vadd.f32 0.0, %v252
    %v254 = vpop.f32.mrf.mxu0
    %255 = vdwg.mxu0
    %v256 = vld [vmem:[%s2] sm:$0x1]
    %v257 = vld [vmem:[%s2 + $0x1] sm:$0x1]
    %v258 = vld [vmem:[%s3] sm:$0x1]
    %v259 = vld [vmem:[%s3 + $0x1] sm:$0x1]
    %v262 = vcombine.low %v256, %v257
    %v264 = vunpack.c.l.s4 1966171168
    %v265 = vunpack.c.0.s8 %v264
    %v266 = vlaneseq
    %v267 = vshrl.u32 %v266, 7
    %v268 = vsub.s32 %v265, %v267
    %v269 = vrot.slane %v262, %v268
    %v271 = vunpack.c.l.s4 1966171168
    %v272 = vunpack.c.0.s8 %v271
    %v273 = vlaneseq
    %v274 = vshrl.u32 %v273, 7
    %v275 = vsub.s32 %v272, %v274
    %v276 = vrot.slane %v269, %v275
    %v277 = vsel %vm96, %v276, 0
    %279 = vmatprep.subr.mxu0 0.0
    %280 = vmatpush1.msra.mxu0 0.0
    %281 = vmatprep.subr.mxu0 0.0
    %282 = vmatpush1.msra.mxu0 0.0
    %283 = vmatprep.subr.mxu0 0.0
    %284 = vmatpush1.msra.mxu0 0.0
    %285 = vmatprep.subr.mxu0 0.0
    %286 = vmatpush1.msra.mxu0 0.0
    %287 = vmatprep.subr.mxu0 0.0
    %288 = vmatpush1.msra.mxu0 0.0
    %289 = vmatprep.subr.mxu0 0.0
    %290 = vmatpush1.msra.mxu0 0.0
    %291 = vmatprep.subr.mxu0 0.0
    %292 = vmatpush1.msra.mxu0 0.0
    %293 = vmatprep.subr.mxu0 0.0
    %294 = vmatpush1.msra.mxu0 0.0
    %295 = vmatprep.subr.mxu0 0.0
    %296 = vmatpush1.msra.mxu0 0.0
    %297 = vmatprep.subr.mxu0 0.0
    %298 = vmatpush1.msra.mxu0 0.0
    %299 = vmatprep.subr.mxu0 0.0
    %300 = vmatpush1.msra.mxu0 0.0
    %301 = vmatprep.subr.mxu0 0.0
    %302 = vmatpush1.msra.mxu0 0.0
    %303 = vmatprep.subr.mxu0 0.0
    %304 = vmatpush1.msra.mxu0 %v88
    %305 = vmatprep.subr.mxu0 0.0
    %306 = vmatpush1.msra.mxu0 %v87
    %307 = vmatprep.subr.mxu0 0.0
    %308 = vmatpush1.msra.mxu0 %v86
    %309 = vmatprep.subr.mxu0 0.0
    %310 = vmatpush1.msra.mxu0 %v85
    %311 = vmatprep.subr.mxu0 0.0
    %312 = vmatpush2.msra.mxu0 0.0
    %313 = vmatprep.subr.mxu0 0.0
    %314 = vmatpush2.msra.mxu0 0.0
    %315 = vmatprep.subr.mxu0 0.0
    %316 = vmatpush2.msra.mxu0 0.0
    %317 = vmatprep.subr.mxu0 0.0
    %318 = vmatpush2.msra.mxu0 0.0
    %319 = vmatprep.subr.mxu0 0.0
    %320 = vmatpush2.msra.mxu0 0.0
    %321 = vmatprep.subr.mxu0 0.0
    %322 = vmatpush2.msra.mxu0 0.0
    %323 = vmatprep.subr.mxu0 0.0
    %324 = vmatpush2.msra.mxu0 0.0
    %325 = vmatprep.subr.mxu0 0.0
    %326 = vmatpush2.msra.mxu0 0.0
    %327 = vmatprep.subr.mxu0 0.0
    %328 = vmatpush2.msra.mxu0 0.0
    %329 = vmatprep.subr.mxu0 0.0
    %330 = vmatpush2.msra.mxu0 0.0
    %331 = vmatprep.subr.mxu0 0.0
    %332 = vmatpush2.msra.mxu0 0.0
    %333 = vmatprep.subr.mxu0 0.0
    %334 = vmatpush2.msra.mxu0 0.0
    %335 = vmatprep.subr.mxu0 0.0
    %336 = vmatpush2.msra.mxu0 0.0
    %337 = vmatprep.subr.mxu0 0.0
    %338 = vmatpush2.msra.mxu0 0.0
    %339 = vmatprep.subr.mxu0 0.0
    %340 = vmatpush2.msra.mxu0 0.0
    %341 = vmatprep.subr.mxu0 0.0
    %342 = vmatpush2.msra.mxu0 0.0
    %343 = vmatprep.mubr.f32.mxu0 0.0
    %344 = vmatmul.mubr.f32.gmra.mxu0 %v277
    %v345 = vpop.f32.mrf.mxu0
    %v346 = vadd.f32 %v94, %v345
    %v347 = vpop.f32.mrf.mxu0
    %348 = vdwg.mxu0
    %v351 = vcombine.low %v258, %v259
    %v353 = vunpack.c.l.s4 1966171168
    %v354 = vunpack.c.0.s8 %v353
    %v355 = vlaneseq
    %v356 = vshrl.u32 %v355, 7
    %v357 = vsub.s32 %v354, %v356
    %v358 = vrot.slane %v351, %v357
    %v360 = vunpack.c.l.s4 1966171168
    %v361 = vunpack.c.0.s8 %v360
    %v362 = vlaneseq
    %v363 = vshrl.u32 %v362, 7
    %v364 = vsub.s32 %v361, %v363
    %v365 = vrot.slane %v358, %v364
    %v366 = vsel %vm96, %v365, 0
    %368 = vmatprep.subr.mxu0 0.0
    %369 = vmatpush1.msra.mxu0 0.0
    %370 = vmatprep.subr.mxu0 0.0
    %371 = vmatpush1.msra.mxu0 0.0
    %372 = vmatprep.subr.mxu0 0.0
    %373 = vmatpush1.msra.mxu0 0.0
    %374 = vmatprep.subr.mxu0 0.0
    %375 = vmatpush1.msra.mxu0 0.0
    %376 = vmatprep.subr.mxu0 0.0
    %377 = vmatpush1.msra.mxu0 0.0
    %378 = vmatprep.subr.mxu0 0.0
    %379 = vmatpush1.msra.mxu0 0.0
    %380 = vmatprep.subr.mxu0 0.0
    %381 = vmatpush1.msra.mxu0 0.0
    %382 = vmatprep.subr.mxu0 0.0
    %383 = vmatpush1.msra.mxu0 0.0
    %384 = vmatprep.subr.mxu0 0.0
    %385 = vmatpush1.msra.mxu0 0.0
    %386 = vmatprep.subr.mxu0 0.0
    %387 = vmatpush1.msra.mxu0 0.0
    %388 = vmatprep.subr.mxu0 0.0
    %389 = vmatpush1.msra.mxu0 0.0
    %390 = vmatprep.subr.mxu0 0.0
    %391 = vmatpush1.msra.mxu0 0.0
    %392 = vmatprep.subr.mxu0 0.0
    %393 = vmatpush1.msra.mxu0 %v182
    %394 = vmatprep.subr.mxu0 0.0
    %395 = vmatpush1.msra.mxu0 %v181
    %396 = vmatprep.subr.mxu0 0.0
    %397 = vmatpush1.msra.mxu0 %v180
    %398 = vmatprep.subr.mxu0 0.0
    %399 = vmatpush1.msra.mxu0 %v179
    %400 = vmatprep.subr.mxu0 0.0
    %401 = vmatpush2.msra.mxu0 0.0
    %402 = vmatprep.subr.mxu0 0.0
    %403 = vmatpush2.msra.mxu0 0.0
    %404 = vmatprep.subr.mxu0 0.0
    %405 = vmatpush2.msra.mxu0 0.0
    %406 = vmatprep.subr.mxu0 0.0
    %407 = vmatpush2.msra.mxu0 0.0
    %408 = vmatprep.subr.mxu0 0.0
    %409 = vmatpush2.msra.mxu0 0.0
    %410 = vmatprep.subr.mxu0 0.0
    %411 = vmatpush2.msra.mxu0 0.0
    %412 = vmatprep.subr.mxu0 0.0
    %413 = vmatpush2.msra.mxu0 0.0
    %414 = vmatprep.subr.mxu0 0.0
    %415 = vmatpush2.msra.mxu0 0.0
    %416 = vmatprep.subr.mxu0 0.0
    %417 = vmatpush2.msra.mxu0 0.0
    %418 = vmatprep.subr.mxu0 0.0
    %419 = vmatpush2.msra.mxu0 0.0
    %420 = vmatprep.subr.mxu0 0.0
    %421 = vmatpush2.msra.mxu0 0.0
    %422 = vmatprep.subr.mxu0 0.0
    %423 = vmatpush2.msra.mxu0 0.0
    %424 = vmatprep.subr.mxu0 0.0
    %425 = vmatpush2.msra.mxu0 0.0
    %426 = vmatprep.subr.mxu0 0.0
    %427 = vmatpush2.msra.mxu0 0.0
    %428 = vmatprep.subr.mxu0 0.0
    %429 = vmatpush2.msra.mxu0 0.0
    %430 = vmatprep.subr.mxu0 0.0
    %431 = vmatpush2.msra.mxu0 0.0
    %432 = vmatprep.mubr.f32.mxu0 0.0
    %433 = vmatmul.mubr.f32.gmra.mxu0 %v366
    %v434 = vpop.f32.mrf.mxu0
    %v435 = vadd.f32 0.0, %v434
    %v436 = vpop.f32.mrf.mxu0
    %437 = vdwg.mxu0
    %v438 = vadd.f32 %v346, %v435
    %v441 = vunpack.c.l.s4 1966171168
    %v442 = vunpack.c.0.s8 %v441
    %v443 = vlaneseq
    %v444 = vshrl.u32 %v443, 7
    %v445 = vsub.s32 %v442, %v444
    %v446 = vrot.slane %v438, %v445
    %v447 = vcombine.high %v446, %v446
    %v449 = vunpack.c.l.s4 1966171168
    %v450 = vunpack.c.0.s8 %v449
    %v451 = vlaneseq
    %v452 = vshrl.u32 %v451, 7
    %v453 = vsub.s32 %v450, %v452
    %v454 = vrot.slane %v446, %v453
    %v456 = vunpack.c.l.s4 1966171168
    %v457 = vunpack.c.0.s8 %v456
    %v458 = vlaneseq
    %v459 = vshrl.u32 %v458, 7
    %v460 = vsub.s32 %v457, %v459
    %v461 = vrot.slane %v447, %v460
    %vm464 = vcmask 253952
    %465 = vst.msk [vmem:[#allocation11] sm:$0x1] %vm464, %v454
    %466 = vst.msk [vmem:[#allocation11 + $0x1] sm:$0x1] %vm464, %v461
    %468 = vrot.lane.b32.xlu0 %v170, 32
    %v469 = vpop.permute.xlu0 %468
    %471 = vrot.lane.b32.xlu0 %v170, 64
    %v472 = vpop.permute.xlu0 %471
    %474 = vrot.lane.b32.xlu0 %v170, 96
    %v475 = vpop.permute.xlu0 %474
    %v477 = vsel %vm96, %v170, %v469
    %vm478 = vcmask 523264
    %v479 = vsel %vm478, %v477, %v472
    %vm480 = vcmask 785408
    %v481 = vsel %vm480, %v479, %v475
    %v483 = vrot.slane %v253, 1
    %484 = vrot.lane.b32.xlu0 %v483, 32
    %v485 = vpop.permute.xlu0 %484
    %v487 = vrot.slane %v253, 2
    %488 = vrot.lane.b32.xlu0 %v487, 64
    %v489 = vpop.permute.xlu0 %488
    %v491 = vrot.slane %v253, 3
    %492 = vrot.lane.b32.xlu0 %v491, 96
    %v493 = vpop.permute.xlu0 %492
    %v495 = vsel %vm96, %v253, %v485
    %v496 = vsel %vm478, %v495, %v489
    %v497 = vsel %vm480, %v496, %v493
    %v498 = vlaneseq
    %v499 = vshrl.u32 %v498, 7
    %v500 = vsub.s32 0, %v499
    %v501 = vrot.slane %v497, %v500
    %v502 = vadd.f32 %v481, %v501
    %504 = vrot.lane.b32.xlu0 %v175, 32
    %v505 = vpop.permute.xlu0 %504
    %507 = vrot.lane.b32.xlu0 %v175, 64
    %v508 = vpop.permute.xlu0 %507
    %510 = vrot.lane.b32.xlu0 %v175, 96
    %v511 = vpop.permute.xlu0 %510
    %v513 = vsel %vm96, %v175, %v505
    %v514 = vsel %vm478, %v513, %v508
    %v515 = vsel %vm480, %v514, %v511
    %v516 = vlaneseq
    %v517 = vshrl.u32 %v516, 7
    %v518 = vsub.s32 4, %v517
    %v519 = vrot.slane %v497, %v518
    %v520 = vadd.f32 %v515, %v519
    %521 = vst [vmem:[#allocation10] sm:$0xff] %v502
    %522 = vst [vmem:[#allocation10 + $0x8] sm:$0xff] %v520
    // Predicated region
    $region46: #{tpu_custom_call.1} parent=1 // pred_check
      _
    $region47: #{tpu_custom_call.1} parent=1 // pred_check_branch
      %524 = sbr.rel (0) target = $region49
    $region48: #{tpu_custom_call.1} parent=1 // pred_region
      %s526 = ssub.s32 256, 256
      %527 = vsyncadd [#allocation4], %s526
      %s528 = sshll.u32 [#allocation10], 4
      %s529 = int_to_ptr.vmem [resolvable:$true] %s528
      %534 = dma.vmem_to_hbm [thread:$0]  %s529, 256, %s7, [#allocation4], 128, 128, 8
    $region49: #{tpu_custom_call.1} parent=1 // pred_fallthru
      _
    // Predicated region
    $region50: #{tpu_custom_call.1} parent=1 // pred_check
      _
    $region51: #{tpu_custom_call.1} parent=1 // pred_check_branch
      %536 = sbr.rel (0) target = $region53
    $region52: #{tpu_custom_call.1} parent=1 // pred_region
      %s538 = ssub.s32 32, 32
      %539 = vsyncadd [#allocation12], %s538
      %s540 = sshll.u32 [#allocation11], 4
      %s541 = int_to_ptr.vmem [resolvable:$true] %s540
      %546 = dma.vmem_to_hbm [thread:$0]  %s541, 32, %s8, [#allocation12], 16, 16, 1
    $region53: #{tpu_custom_call.1} parent=1 // pred_fallthru
      _
    // Predicated region
    $region54: #{tpu_custom_call.1} parent=1 // pred_check
      _
    $region55: #{tpu_custom_call.1} parent=1 // pred_check_branch
      %548 = sbr.rel (0) target = $region57
    $region56: #{tpu_custom_call.1} parent=1 // pred_region
      %549 = dma.done [#allocation4], 256
    $region57: #{tpu_custom_call.1} parent=1 // pred_fallthru
      _
    // Predicated region
    $region58: #{tpu_custom_call.1} parent=1 // pred_check
      _
    $region59: #{tpu_custom_call.1} parent=1 // pred_check_branch
      %551 = sbr.rel (0) target = $region61
    $region60: #{tpu_custom_call.1} parent=1 // pred_region
      %552 = dma.done [#allocation12], 32
    $region61: #{tpu_custom_call.1} parent=1 // pred_fallthru
      _
    %553 = vsyncpa [#allocation3], 1
    %554 = vsyncpa [#allocation6], 1
    %555 = vsyncpa [#allocation9], 1
    %556 = vsyncpa [#allocation4], 1
    %557 = vsyncpa [#allocation12], 1

</llo_original>
